<compile_context>
chip_gen: v6e
topology: v6e:2x2x1
jax: 0.10.0
libtpu: 0.0.40
codegen_flags: <defaults>
</compile_context>

<pallas_src>
import jax
import jax.numpy as jnp
from jax.experimental import pallas as pl
from jax.experimental.pallas import tpu as pltpu


def _round_up(n, m):
    return ((n + m - 1) // m) * m


def _xor_mlp_kernel(x_ref, w1_ref, b1_ref, w2_ref, b2_ref, w3t_ref, b3_ref, o_ref):
    x = x_ref[...].astype(jnp.float32)                 # (tm, in_size), in_size tiny
    tm = x.shape[0]
    n_in = w1_ref.shape[0]                             # static (e.g. 2)
    h1_size = w1_ref.shape[1]                          # 128

    # ---- Layer 1: K = n_in tiny -> VPU broadcast-FMA, skip the MXU ----------
    h1 = jnp.broadcast_to(b1_ref[...], (tm, h1_size))
    for k in range(n_in):                              # statically unrolled
        h1 = h1 + x[:, k:k + 1] * w1_ref[k:k + 1, :].astype(jnp.float32)
    h1 = jnp.maximum(h1, 0.0)                          # ReLU

    # ---- Layer 2: (tm,128)x(128,256) on the MXU, bf16 in / f32 accumulate ---
    h2 = jnp.dot(h1.astype(jnp.bfloat16), w2_ref[...],
                 preferred_element_type=jnp.float32) + b2_ref[...]
    h2 = jnp.maximum(h2, 0.0)                          # ReLU

    # ---- Layer 3: out_size tiny -> VPU mul + XLU lane reduce (no padded w3) --
    w3t = w3t_ref[...].astype(jnp.float32)             # (out_size, 256)
    out_size = w3t.shape[0]
    cols = [jnp.sum(h2 * w3t[j:j + 1, :], axis=-1, keepdims=True)
            for j in range(out_size)]                  # each (tm, 1)
    logits = cols[0] if out_size == 1 else jnp.concatenate(cols, axis=-1)
    logits = logits + b3_ref[...]                      # (tm, out_size)

    # Sigmoid via tanh identity: single EUP op, exact to f32 rounding.
    o_ref[...] = 0.5 * (1.0 + jnp.tanh(0.5 * logits))


def prepare_params(params):
    """One-time conversion to kernel-ready layout (do NOT call per forward)."""
    return {
        "w1": params["w1"].astype(jnp.bfloat16),                   # (in, 128)
        "b1": params["b1"].astype(jnp.float32).reshape(1, -1),     # (1, 128)
        "w2": params["w2"].astype(jnp.bfloat16),                   # (128, 256)
        "b2": params["b2"].astype(jnp.float32).reshape(1, -1),     # (1, 256)
        "w3t": params["w3"].T.astype(jnp.bfloat16),                # (out, 256)
        "b3": params["b3"].astype(jnp.float32).reshape(1, -1),     # (1, out)
    }


def _pick_tile(b):
    if b > 512:
        return 512                                     # >=2 tiles -> v7x 2 TCs
    if b > 256:
        return _round_up((b + 1) // 2, 8)               # split into 2 tiles
    return _round_up(max(b, 1), 8)                      # single tile


def xor_classifier_forward(x, prepared):
    """x: (B, input_size); prepared: output of prepare_params()."""
    w1, b1 = prepared["w1"], prepared["b1"]
    w2, b2 = prepared["w2"], prepared["b2"]
    w3t, b3 = prepared["w3t"], prepared["b3"]

    B, in_size = x.shape
    h1_size, h2_size = w1.shape[1], w2.shape[1]
    out_size = w3t.shape[0]

    tm = _pick_tile(B)
    b_pad = _round_up(B, tm)
    x_f = x.astype(jnp.float32)
    if b_pad != B:
        x_f = jnp.pad(x_f, ((0, b_pad - B), (0, 0)))
    grid = (b_pad // tm,)

    def resident(arr):
        # Full-array resident block: DMA'd once, index_map constant across grid.
        return pl.BlockSpec(arr.shape, lambda i: (0, 0))

    flops = 2 * b_pad * (in_size * h1_size + h1_size * h2_size + h2_size * out_size)
    bytes_accessed = (
        x_f.size * 4
        + w1.size * 2 + b1.size * 4
        + w2.size * 2 + b2.size * 4
        + w3t.size * 2 + b3.size * 4
        + b_pad * out_size * 4
    )

    out = pl.pallas_call(
        _xor_mlp_kernel,
        out_shape=jax.ShapeDtypeStruct((b_pad, out_size), jnp.float32),
        grid=grid,
        in_specs=[
            pl.BlockSpec((tm, in_size), lambda i: (i, 0)),   # narrow x tiles stream
            resident(w1), resident(b1),
            resident(w2), resident(b2),
            resident(w3t), resident(b3),
        ],
        out_specs=pl.BlockSpec((tm, out_size), lambda i: (i, 0)),  # narrow output
        compiler_params=pltpu.CompilerParams(
            dimension_semantics=("parallel",)),              # shard batch on v7x TCs
        cost_estimate=pl.CostEstimate(
            flops=flops,
            transcendentals=b_pad * out_size,                # one tanh per output
            bytes_accessed=bytes_accessed),
    )(x_f, w1, b1, w2, b2, w3t, b3)

    return out[:B]


def init_params(key, input_size, output_size):
    """PyTorch-Linear-style init U(-1/sqrt(fan_in), 1/sqrt(fan_in)).
    Weights stored transposed vs. PyTorch, i.e. (in_features, out_features)."""
    dims = [(input_size, 128), (128, 256), (256, output_size)]
    params = {}
    for idx, (fan_in, fan_out) in enumerate(dims, start=1):
        key, kw, kb = jax.random.split(key, 3)
        bound = 1.0 / jnp.sqrt(jnp.float32(fan_in))
        params[f"w{idx}"] = jax.random.uniform(
            kw, (fan_in, fan_out), jnp.float32, -bound, bound)
        params[f"b{idx}"] = jax.random.uniform(
            kb, (1, fan_out), jnp.float32, -bound, bound)
    return params


if __name__ == "__main__":
    key = jax.random.PRNGKey(0)
    input_size, output_size, batch = 2, 1, 8

    kp, _ = jax.random.split(key)
    params = init_params(kp, input_size, output_size)
    prepared = prepare_params(params)          # one-time weight conversion

    # XOR-style inputs (0/1 pairs, repeated to batch=8).
    base = jnp.array([[0.0, 0.0], [0.0, 1.0], [1.0, 0.0], [1.0, 1.0]], jnp.float32)
    x = jnp.concatenate([base, base], axis=0)

    out = xor_classifier_forward(x, prepared)
    out = jax.block_until_ready(out)

    # Pure-JAX reference matching the kernel's precision path
    # (bf16 weights, f32 accumulation, exact sigmoid).
    w1q = params["w1"].astype(jnp.bfloat16).astype(jnp.float32)
    h1 = jnp.maximum(x @ w1q + params["b1"], 0.0)
    h2 = jnp.maximum(
        jnp.dot(h1.astype(jnp.bfloat16), params["w2"].astype(jnp.bfloat16),
                preferred_element_type=jnp.float32) + params["b2"], 0.0)
    w3q = params["w3"].astype(jnp.bfloat16).astype(jnp.float32)
    logits = h2 @ w3q + params["b3"]
    ref = jax.nn.sigmoid(logits)

    assert out.shape == (batch, output_size), out.shape
    assert jnp.allclose(out, ref, atol=1e-2), "mismatch vs reference"

    print("KERNEL_OK")
</pallas_src>

<mosaic_0001>
module attributes {stable_mosaic.version = 11 : i64} {
  func.func @_xor_mlp_kernel(%arg0: i32, %arg1: memref<8x2xf32, #tpu.memory_space<vmem>>, %arg2: memref<2x128xbf16, #tpu.memory_space<vmem>>, %arg3: memref<1x128xf32, #tpu.memory_space<vmem>>, %arg4: memref<128x256xbf16, #tpu.memory_space<vmem>>, %arg5: memref<1x256xf32, #tpu.memory_space<vmem>>, %arg6: memref<1x256xbf16, #tpu.memory_space<vmem>>, %arg7: memref<1x1xf32, #tpu.memory_space<vmem>>, %arg8: memref<8x1xf32, #tpu.memory_space<vmem>>) attributes {dimension_semantics = [#tpu.dimension_semantics<parallel>], iteration_bounds = array<i64: 1>, scalar_prefetch = 0 : i64, scratch_operands = 0 : i64, tpu.core_type = #tpu.core_type<tc>, window_params = [{transform_indices = @transform_0, window_bounds = array<i64: 8, 2>}, {pipeline_mode = #tpu.pipeline_mode<synchronous>, transform_indices = @transform_1, window_bounds = array<i64: 2, 128>}, {pipeline_mode = #tpu.pipeline_mode<synchronous>, transform_indices = @transform_2, window_bounds = array<i64: 1, 128>}, {pipeline_mode = #tpu.pipeline_mode<synchronous>, transform_indices = @transform_3, window_bounds = array<i64: 128, 256>}, {pipeline_mode = #tpu.pipeline_mode<synchronous>, transform_indices = @transform_4, window_bounds = array<i64: 1, 256>}, {pipeline_mode = #tpu.pipeline_mode<synchronous>, transform_indices = @transform_5, window_bounds = array<i64: 1, 256>}, {pipeline_mode = #tpu.pipeline_mode<synchronous>, transform_indices = @transform_6, window_bounds = array<i64: 1, 1>}, {transform_indices = @transform_7, window_bounds = array<i64: 8, 1>}]} {
    %c0 = arith.constant 0 : index
    %c0_0 = arith.constant 0 : index
    %0 = vector.load %arg1[%c0, %c0_0] : memref<8x2xf32, #tpu.memory_space<vmem>>, vector<8x2xf32>
    %c0_1 = arith.constant 0 : index
    %c0_2 = arith.constant 0 : index
    %1 = vector.load %arg3[%c0_1, %c0_2] : memref<1x128xf32, #tpu.memory_space<vmem>>, vector<1x128xf32>
    %2 = vector.shape_cast %1 : vector<1x128xf32> to vector<1x128xf32>
    %3 = vector.broadcast %2 : vector<1x128xf32> to vector<8x128xf32>
    %4 = vector.extract_strided_slice %0 {offsets = [0, 0], sizes = [8, 1], strides = [1, 1]} : vector<8x2xf32> to vector<8x1xf32>
    %c0_3 = arith.constant 0 : index
    %c0_4 = arith.constant 0 : index
    %5 = vector.load %arg2[%c0_3, %c0_4] : memref<2x128xbf16, #tpu.memory_space<vmem>>, vector<1x128xbf16>
    %6 = arith.extf %5 : vector<1x128xbf16> to vector<1x128xf32>
    %7 = vector.broadcast %4 : vector<8x1xf32> to vector<8x128xf32>
    %8 = vector.broadcast %6 : vector<1x128xf32> to vector<8x128xf32>
    %9 = arith.mulf %7, %8 : vector<8x128xf32>
    %10 = arith.addf %3, %9 : vector<8x128xf32>
    %11 = vector.extract_strided_slice %0 {offsets = [0, 1], sizes = [8, 1], strides = [1, 1]} : vector<8x2xf32> to vector<8x1xf32>
    %c1 = arith.constant 1 : index
    %c0_5 = arith.constant 0 : index
    %12 = vector.load %arg2[%c1, %c0_5] : memref<2x128xbf16, #tpu.memory_space<vmem>>, vector<1x128xbf16>
    %13 = arith.extf %12 : vector<1x128xbf16> to vector<1x128xf32>
    %14 = vector.broadcast %11 : vector<8x1xf32> to vector<8x128xf32>
    %15 = vector.broadcast %13 : vector<1x128xf32> to vector<8x128xf32>
    %16 = arith.mulf %14, %15 : vector<8x128xf32>
    %17 = arith.addf %10, %16 : vector<8x128xf32>
    %cst = arith.constant 0.000000e+00 : f32
    %18 = vector.broadcast %cst : f32 to vector<8x128xf32>
    %19 = arith.maximumf %17, %18 : vector<8x128xf32>
    %20 = arith.truncf %19 : vector<8x128xf32> to vector<8x128xbf16>
    %c0_6 = arith.constant 0 : index
    %c0_7 = arith.constant 0 : index
    %21 = vector.load %arg4[%c0_6, %c0_7] : memref<128x256xbf16, #tpu.memory_space<vmem>>, vector<128x256xbf16>
    %cst_8 = arith.constant dense<0.000000e+00> : vector<8x256xf32>
    %22 = tpu.matmul %20, %21, %cst_8 {dimension_numbers = #tpu.dot_dimension_numbers<[1], [0], [0], [1], [0, 0, 1, 1], [], []>} : vector<8x128xbf16>, vector<128x256xbf16>, vector<8x256xf32> -> vector<8x256xf32>
    %c0_9 = arith.constant 0 : index
    %c0_10 = arith.constant 0 : index
    %23 = vector.load %arg5[%c0_9, %c0_10] : memref<1x256xf32, #tpu.memory_space<vmem>>, vector<1x256xf32>
    %24 = vector.broadcast %23 : vector<1x256xf32> to vector<8x256xf32>
    %25 = arith.addf %22, %24 : vector<8x256xf32>
    %cst_11 = arith.constant 0.000000e+00 : f32
    %26 = vector.broadcast %cst_11 : f32 to vector<8x256xf32>
    %27 = arith.maximumf %25, %26 : vector<8x256xf32>
    %c0_12 = arith.constant 0 : index
    %c0_13 = arith.constant 0 : index
    %28 = vector.load %arg6[%c0_12, %c0_13] : memref<1x256xbf16, #tpu.memory_space<vmem>>, vector<1x256xbf16>
    %29 = arith.extf %28 : vector<1x256xbf16> to vector<1x256xf32>
    %30 = vector.broadcast %29 : vector<1x256xf32> to vector<8x256xf32>
    %31 = arith.mulf %27, %30 : vector<8x256xf32>
    %cst_14 = arith.constant dense<0.000000e+00> : vector<8xf32>
    %32 = vector.multi_reduction <add>, %31, %cst_14 [1] : vector<8x256xf32> to vector<8xf32>
    %33 = vector.shape_cast %32 : vector<8xf32> to vector<8x1xf32>
    %c0_15 = arith.constant 0 : index
    %c0_16 = arith.constant 0 : index
    %34 = vector.load %arg7[%c0_15, %c0_16] : memref<1x1xf32, #tpu.memory_space<vmem>>, vector<1x1xf32>
    %35 = vector.broadcast %34 : vector<1x1xf32> to vector<8x1xf32>
    %36 = arith.addf %33, %35 : vector<8x1xf32>
    %cst_17 = arith.constant 5.000000e-01 : f32
    %37 = vector.broadcast %cst_17 : f32 to vector<8x1xf32>
    %38 = arith.mulf %37, %36 : vector<8x1xf32>
    %39 = math.tanh %38 : vector<8x1xf32>
    %cst_18 = arith.constant 1.000000e+00 : f32
    %40 = vector.broadcast %cst_18 : f32 to vector<8x1xf32>
    %41 = arith.addf %40, %39 : vector<8x1xf32>
    %cst_19 = arith.constant 5.000000e-01 : f32
    %42 = vector.broadcast %cst_19 : f32 to vector<8x1xf32>
    %43 = arith.mulf %42, %41 : vector<8x1xf32>
    %c0_20 = arith.constant 0 : index
    %c0_21 = arith.constant 0 : index
    %44 = vector.load %arg8[%c0_20, %c0_21] : memref<8x1xf32, #tpu.memory_space<vmem>>, vector<8x1xf32>
    tpu.vector_store %arg8[%c0_20, %c0_21], %43 {strides = array<i32>} : memref<8x1xf32, #tpu.memory_space<vmem>>, vector<8x1xf32>,
    return
  }
  func.func @transform_0(%arg0: i32) -> (i32, i32) {
    %c0_i32 = arith.constant 0 : i32
    %c0_i32_0 = arith.constant 0 : i32
    return %arg0, %c0_i32 : i32, i32
  }
  func.func @transform_1(%arg0: i32) -> (i32, i32) {
    %c0_i32 = arith.constant 0 : i32
    %c0_i32_0 = arith.constant 0 : i32
    %c0_i32_1 = arith.constant 0 : i32
    return %c0_i32, %c0_i32_0 : i32, i32
  }
  func.func @transform_2(%arg0: i32) -> (i32, i32) {
    %c0_i32 = arith.constant 0 : i32
    %c0_i32_0 = arith.constant 0 : i32
    %c0_i32_1 = arith.constant 0 : i32
    return %c0_i32, %c0_i32_0 : i32, i32
  }
  func.func @transform_3(%arg0: i32) -> (i32, i32) {
    %c0_i32 = arith.constant 0 : i32
    %c0_i32_0 = arith.constant 0 : i32
    %c0_i32_1 = arith.constant 0 : i32
    return %c0_i32, %c0_i32_0 : i32, i32
  }
  func.func @transform_4(%arg0: i32) -> (i32, i32) {
    %c0_i32 = arith.constant 0 : i32
    %c0_i32_0 = arith.constant 0 : i32
    %c0_i32_1 = arith.constant 0 : i32
    return %c0_i32, %c0_i32_0 : i32, i32
  }
  func.func @transform_5(%arg0: i32) -> (i32, i32) {
    %c0_i32 = arith.constant 0 : i32
    %c0_i32_0 = arith.constant 0 : i32
    %c0_i32_1 = arith.constant 0 : i32
    return %c0_i32, %c0_i32_0 : i32, i32
  }
  func.func @transform_6(%arg0: i32) -> (i32, i32) {
    %c0_i32 = arith.constant 0 : i32
    %c0_i32_0 = arith.constant 0 : i32
    %c0_i32_1 = arith.constant 0 : i32
    return %c0_i32, %c0_i32_0 : i32, i32
  }
  func.func @transform_7(%arg0: i32) -> (i32, i32) {
    %c0_i32 = arith.constant 0 : i32
    %c0_i32_0 = arith.constant 0 : i32
    return %arg0, %c0_i32 : i32, i32
  }
}

</mosaic_0001>

<llo_original>
// kernel: tpu_custom_call.1
$region0: #{tpu_custom_call.1}
  #allocation0 [shape = 'u32[]', space=smem, size = 0x4, offset = 0x4, fixed_abs, tag = 'smem constant byte address 0x4 - core index']
  #allocation1 [shape = 'u32[144,128]{1,0:T(1,128)}', space=vmem, size = 0x12000, scoped, tag = 'internal scratch']
  #allocation2 [shape = 'f32[1,1]{1,0:T(1,128)S(1)}', space=vmem, size = 0x200, scoped, tag = 'scoped memory for tpu_custom_call.1']
  %s0 = inlined_call_operand.vmem [shape: f32[8,2], index: 0, kind: input, shape index: {}]
  %s1 = inlined_call_operand.vmem [shape: bf16[2,128], index: 1, kind: input, shape index: {}]
  %s2 = inlined_call_operand.vmem [shape: f32[1,128], index: 2, kind: input, shape index: {}]
  %s3 = inlined_call_operand.hbm [shape: bf16[128,256], index: 3, kind: input, shape index: {}]
  %s4 = inlined_call_operand.vmem [shape: f32[1,256], index: 4, kind: input, shape index: {}]
  %s5 = inlined_call_operand.vmem [shape: bf16[1,256], index: 5, kind: input, shape index: {}]
  %s6 = inlined_call_operand.<no memory space> [shape: f32[1,1], index: 6, kind: input, shape index: {}]
  %s7 = inlined_call_operand.vmem [shape: f32[8,1], index: 7, kind: output, shape index: {}]
  %s8 = sld [smem:[#allocation0]]
  $region42: #{tpu_custom_call.1} parent=0
    _
  %s10 = ssub.s32 1, %s8
  %s11 = scalar_select 0, %s10, %s8
  %v12 = vstv %s6
  %13 = vst [vmem:[#allocation2] sm:$0x1] %v12
  $region1: #{tpu_custom_call.1} parent=0
    #allocation3 [shape = 'u8[65536]{0}', space=vmem, size = 0x10000, scoped, tag = 'input window, operand 3, single buffered']
    #allocation4 [shape = 's32[1]{0}', space=sflag, size = 0x4, scoped, tag = 'scoped memory for tpu_custom_call.1']
    %14 = vsyncpa [#allocation4], 0
    // Predicated region
    $region2: #{tpu_custom_call.1} parent=1 // pred_check
      _
    $region3: #{tpu_custom_call.1} parent=1 // pred_check_branch
      %16 = sbr.rel (0) target = $region5
    $region4: #{tpu_custom_call.1} parent=1 // pred_region
      _
    $region5: #{tpu_custom_call.1} parent=1 // pred_fallthru
      _
    // Predicated region
    $region6: #{tpu_custom_call.1} parent=1 // pred_check
      _
    $region7: #{tpu_custom_call.1} parent=1 // pred_check_branch
      %18 = sbr.rel (0) target = $region9
    $region8: #{tpu_custom_call.1} parent=1 // pred_region
      _
    $region9: #{tpu_custom_call.1} parent=1 // pred_fallthru
      _
    // Predicated region
    $region10: #{tpu_custom_call.1} parent=1 // pred_check
      _
    $region11: #{tpu_custom_call.1} parent=1 // pred_check_branch
      %20 = sbr.rel (0) target = $region13
    $region12: #{tpu_custom_call.1} parent=1 // pred_region
      _
    $region13: #{tpu_custom_call.1} parent=1 // pred_fallthru
      _
    // Predicated region
    $region14: #{tpu_custom_call.1} parent=1 // pred_check
      _
    $region15: #{tpu_custom_call.1} parent=1 // pred_check_branch
      %22 = sbr.rel (0) target = $region17
    $region16: #{tpu_custom_call.1} parent=1 // pred_region
      %s24 = ssub.s32 2048, 2048
      %25 = vsyncadd [#allocation4], %s24
      %s26 = sshll.u32 [#allocation3], 4
      %s27 = int_to_ptr.vmem [resolvable:$true] %s26
      %32 = dma.hbm_to_vmem [thread:$0]  %s3, 2048, %s27, [#allocation4], 128, 128, 8
    $region17: #{tpu_custom_call.1} parent=1 // pred_fallthru
      _
    // Predicated region
    $region18: #{tpu_custom_call.1} parent=1 // pred_check
      _
    $region19: #{tpu_custom_call.1} parent=1 // pred_check_branch
      %34 = sbr.rel (0) target = $region21
    $region20: #{tpu_custom_call.1} parent=1 // pred_region
      _
    $region21: #{tpu_custom_call.1} parent=1 // pred_fallthru
      _
    // Predicated region
    $region22: #{tpu_custom_call.1} parent=1 // pred_check
      _
    $region23: #{tpu_custom_call.1} parent=1 // pred_check_branch
      %36 = sbr.rel (0) target = $region25
    $region24: #{tpu_custom_call.1} parent=1 // pred_region
      _
    $region25: #{tpu_custom_call.1} parent=1 // pred_fallthru
      _
    // Predicated region
    $region26: #{tpu_custom_call.1} parent=1 // pred_check
      _
    $region27: #{tpu_custom_call.1} parent=1 // pred_check_branch
      %38 = sbr.rel (0) target = $region29
    $region28: #{tpu_custom_call.1} parent=1 // pred_region
      _
    $region29: #{tpu_custom_call.1} parent=1 // pred_fallthru
      _
    // Predicated region
    $region30: #{tpu_custom_call.1} parent=1 // pred_check
      _
    $region31: #{tpu_custom_call.1} parent=1 // pred_check_branch
      %40 = sbr.rel (0) target = $region33
    $region32: #{tpu_custom_call.1} parent=1 // pred_region
      %41 = dma.done [#allocation4], 2048
    $region33: #{tpu_custom_call.1} parent=1 // pred_fallthru
      _
    %v43 = vld [vmem:[%s0] sm:$0xff]
    %v44 = vld [vmem:[%s2] sm:$0x1]
    %v46 = vlaneseq
    %v47 = vshrl.u32 %v46, 7
    %v48 = vsub.s32 0, %v47
    %v49 = vrot.slane %v44, %v48
    %v51 = vld [vmem:[%s1] sm:$0x1]
    %v52 = vunpack.c.l.bf16 %v51
    %54 = vset.pattern.permute.xlu0 0
    %55 = vperm.xlu0 %54, %v43
    %v56 = vpop.permute.xlu0 %55
    %v58 = vlaneseq
    %v59 = vshrl.u32 %v58, 7
    %v60 = vsub.s32 0, %v59
    %v61 = vrot.slane %v52, %v60
    %v62 = vmul.f32 %v56, %v61
    %v63 = vadd.f32 %v49, %v62
    %64 = vset.pattern.permute.xlu0 1
    %65 = vperm.xlu0 %64, %v43
    %v66 = vpop.permute.xlu0 %65
    %v68 = vlaneseq
    %v69 = vshrl.u32 %v68, 7
    %v70 = vsub.s32 1, %v69
    %v71 = vrot.slane %v52, %v70
    %v72 = vmul.f32 %v66, %v71
    %v73 = vadd.f32 %v63, %v72
    %v74 = vmax.f32 %v73, 0.0
    %v75 = vpack.c.bf16 %v74, %v74
    %v76 = vld [vmem:[#allocation3] sm:$0xff]
    %v77 = vld [vmem:[#allocation3 + $0x8] sm:$0xff]
    %v78 = vld [vmem:[#allocation3 + $0x10] sm:$0xff]
    %v79 = vld [vmem:[#allocation3 + $0x18] sm:$0xff]
    %v80 = vld [vmem:[#allocation3 + $0x20] sm:$0xff]
    %v81 = vld [vmem:[#allocation3 + $0x28] sm:$0xff]
    %v82 = vld [vmem:[#allocation3 + $0x30] sm:$0xff]
    %v83 = vld [vmem:[#allocation3 + $0x38] sm:$0xff]
    %v84 = vld [vmem:[#allocation3 + $0x40] sm:$0xff]
    %v85 = vld [vmem:[#allocation3 + $0x48] sm:$0xff]
    %v86 = vld [vmem:[#allocation3 + $0x50] sm:$0xff]
    %v87 = vld [vmem:[#allocation3 + $0x58] sm:$0xff]
    %v88 = vld [vmem:[#allocation3 + $0x60] sm:$0xff]
    %v89 = vld [vmem:[#allocation3 + $0x68] sm:$0xff]
    %v90 = vld [vmem:[#allocation3 + $0x70] sm:$0xff]
    %v91 = vld [vmem:[#allocation3 + $0x78] sm:$0xff]
    %v92 = vld [vmem:[%s4] sm:$0x3]
    %v94 = vlaneseq
    %v95 = vshrl.u32 %v94, 7
    %v96 = vsub.s32 0, %v95
    %v97 = vrot.slane %v92, %v96
    %v98 = vlaneseq
    %v99 = vshrl.u32 %v98, 7
    %v100 = vsub.s32 1, %v99
    %v101 = vrot.slane %v92, %v100
    %v120 = vunpack.c.l.b16 %v76
    %v121 = vunpack.c.h.b16 %v76
    %v122 = vunpack.c.l.b16 %v77
    %v123 = vunpack.c.h.b16 %v77
    %v124 = vunpack.c.l.b16 %v78
    %v125 = vunpack.c.h.b16 %v78
    %v126 = vunpack.c.l.b16 %v79
    %v127 = vunpack.c.h.b16 %v79
    %v128 = vunpack.c.l.b16 %v80
    %v129 = vunpack.c.h.b16 %v80
    %v130 = vunpack.c.l.b16 %v81
    %v131 = vunpack.c.h.b16 %v81
    %v132 = vunpack.c.l.b16 %v82
    %v133 = vunpack.c.h.b16 %v82
    %v134 = vunpack.c.l.b16 %v83
    %v135 = vunpack.c.h.b16 %v83
    %v136 = vunpack.c.l.b16 %v84
    %v137 = vunpack.c.h.b16 %v84
    %v138 = vunpack.c.l.b16 %v85
    %v139 = vunpack.c.h.b16 %v85
    %v140 = vunpack.c.l.b16 %v86
    %v141 = vunpack.c.h.b16 %v86
    %v142 = vunpack.c.l.b16 %v87
    %v143 = vunpack.c.h.b16 %v87
    %v144 = vunpack.c.l.b16 %v88
    %v145 = vunpack.c.h.b16 %v88
    %v146 = vunpack.c.l.b16 %v89
    %v147 = vunpack.c.h.b16 %v89
    %v148 = vunpack.c.l.b16 %v90
    %v149 = vunpack.c.h.b16 %v90
    %v150 = vunpack.c.l.b16 %v91
    %v151 = vunpack.c.h.b16 %v91
    %v152 = vpack.c.b16 %v122, %v120
    %v153 = vpack.c.b16 %v123, %v121
    %v154 = vpack.c.b16 %v126, %v124
    %v155 = vpack.c.b16 %v127, %v125
    %v156 = vpack.c.b16 %v130, %v128
    %v157 = vpack.c.b16 %v131, %v129
    %v158 = vpack.c.b16 %v134, %v132
    %v159 = vpack.c.b16 %v135, %v133
    %v160 = vpack.c.b16 %v138, %v136
    %v161 = vpack.c.b16 %v139, %v137
    %v162 = vpack.c.b16 %v142, %v140
    %v163 = vpack.c.b16 %v143, %v141
    %v164 = vpack.c.b16 %v146, %v144
    %v165 = vpack.c.b16 %v147, %v145
    %v166 = vpack.c.b16 %v150, %v148
    %v167 = vpack.c.b16 %v151, %v149
    %184 = vmatprep.subr.bf16.mxu0 %v167
    %185 = vmatpush1.bf16.msra.mxu0 %v166
    %186 = vmatprep.subr.bf16.mxu0 %v165
    %187 = vmatpush1.bf16.msra.mxu0 %v164
    %188 = vmatprep.subr.bf16.mxu0 %v163
    %189 = vmatpush1.bf16.msra.mxu0 %v162
    %190 = vmatprep.subr.bf16.mxu0 %v161
    %191 = vmatpush1.bf16.msra.mxu0 %v160
    %192 = vmatprep.subr.bf16.mxu0 %v159
    %193 = vmatpush1.bf16.msra.mxu0 %v158
    %194 = vmatprep.subr.bf16.mxu0 %v157
    %195 = vmatpush1.bf16.msra.mxu0 %v156
    %196 = vmatprep.subr.bf16.mxu0 %v155
    %197 = vmatpush1.bf16.msra.mxu0 %v154
    %198 = vmatprep.subr.bf16.mxu0 %v153
    %199 = vmatpush1.bf16.msra.mxu0 %v152
    %200 = vmatprep.subr.bf16.mxu0 0
    %201 = vmatpush2.bf16.msra.mxu0 0
    %202 = vmatprep.subr.bf16.mxu0 0
    %203 = vmatpush2.bf16.msra.mxu0 0
    %204 = vmatprep.subr.bf16.mxu0 0
    %205 = vmatpush2.bf16.msra.mxu0 0
    %206 = vmatprep.subr.bf16.mxu0 0
    %207 = vmatpush2.bf16.msra.mxu0 0
    %208 = vmatprep.subr.bf16.mxu0 0
    %209 = vmatpush2.bf16.msra.mxu0 0
    %210 = vmatprep.subr.bf16.mxu0 0
    %211 = vmatpush2.bf16.msra.mxu0 0
    %212 = vmatprep.subr.bf16.mxu0 0
    %213 = vmatpush2.bf16.msra.mxu0 0
    %214 = vmatprep.subr.bf16.mxu0 0
    %215 = vmatpush2.bf16.msra.mxu0 0
    %216 = vmatprep.mubr.bf16.mxu0 0
    %217 = vmatmul.mubr.bf16.gmra.mxu0 %v75
    %v218 = vpop.f32.mrf.mxu0
    %v219 = vadd.f32 %v97, %v218
    %v220 = vpop.f32.mrf.mxu0
    %v221 = vadd.f32 %v101, %v220
    %v222 = vpop.f32.mrf.mxu0
    %v223 = vpop.f32.mrf.mxu0
    %224 = vdwg.mxu0
    %v225 = vmax.f32 %v219, 0.0
    %v226 = vmax.f32 %v221, 0.0
    %v227 = vld [vmem:[%s5] sm:$0x3]
    %v228 = vunpack.c.l.bf16 %v227
    %v230 = vlaneseq
    %v231 = vshrl.u32 %v230, 7
    %v232 = vsub.s32 0, %v231
    %v233 = vrot.slane %v228, %v232
    %v234 = vlaneseq
    %v235 = vshrl.u32 %v234, 7
    %v236 = vsub.s32 2, %v235
    %v237 = vrot.slane %v228, %v236
    %v240 = vlaneseq
    %v241 = vshrl.u32 %v240, 7
    %v242 = vsub.s32 0, %v241
    %v243 = vrot.slane %v233, %v242
    %v244 = vlaneseq
    %v245 = vshrl.u32 %v244, 7
    %v246 = vsub.s32 0, %v245
    %v247 = vrot.slane %v237, %v246
    %v248 = vmul.f32 %v225, %v243
    %v249 = vmul.f32 %v226, %v247
    %v250 = vadd.f32 %v248, %v249
    %251 = vadd.xlane.f32.xlu0 %v250
    %v252 = vpop.xlane.xlu0 %251
    %v253 = vld [vmem:[#allocation2] sm:$0x1]
    %v255 = vlaneseq
    %v256 = vshrl.u32 %v255, 7
    %v257 = vsub.s32 0, %v256
    %v258 = vrot.slane %v253, %v257
    %v260 = vadd.f32 %v252, %v258
    %v261 = vmul.f32 %v260, 0.5
    %v262 = vtanh.pop %v261
    %v263 = vadd.f32 %v262, 1.0
    %v264 = vmul.f32 %v263, 0.5
    %vm265 = vcmask 7168
    %266 = vst.msk [vmem:[%s7] sm:$0xff] %vm265, %v264
    // Predicated region
    $region34: #{tpu_custom_call.1} parent=1 // pred_check
      _
    $region35: #{tpu_custom_call.1} parent=1 // pred_check_branch
      %268 = sbr.rel (0) target = $region37
    $region36: #{tpu_custom_call.1} parent=1 // pred_region
      _
    $region37: #{tpu_custom_call.1} parent=1 // pred_fallthru
      _
    // Predicated region
    $region38: #{tpu_custom_call.1} parent=1 // pred_check
      _
    $region39: #{tpu_custom_call.1} parent=1 // pred_check_branch
      %270 = sbr.rel (0) target = $region41
    $region40: #{tpu_custom_call.1} parent=1 // pred_region
      _
    $region41: #{tpu_custom_call.1} parent=1 // pred_fallthru
      _
    %271 = vsyncpa [#allocation4], 1

</llo_original>
